<compile_context>
chip_gen: v7x
topology: tpu7x:2x2x1
jax: 0.10.0
libtpu: 0.0.40
codegen_flags: <defaults>
</compile_context>

<pallas_src>
import jax
import jax.numpy as jnp
from jax.experimental import pallas as pl
from jax.experimental.pallas import tpu as pltpu

LANE = 128
THRESHOLD = 20.0  # PyTorch forward hardcodes the literal 20


def learned_softplus_kernel(x_ref, params_ref, o_ref):
    # params_ref lives in SMEM: [beta, 1/beta] as true f32 scalars.
    beta = params_ref[0]
    inv_beta = params_ref[1]

    x = x_ref[...].astype(jnp.float32)          # upcast only inside the kernel
    beta_x = beta * x
    # exp overflows to +inf where beta_x >= threshold; inf * finite = inf, and
    # the select below returns x there, so the result is still correct.
    soft = jnp.log1p(jnp.exp(beta_x)) * inv_beta
    o_ref[...] = jnp.where(beta_x < THRESHOLD, soft, x).astype(o_ref.dtype)


def _round_up(a, b):
    return (a + b - 1) // b * b


def learned_softplus_pallas(x, log_beta, *, target_tile_bytes=4 << 20):
    """Elementwise LearnedSoftPlus over an arbitrarily shaped float array.

    x: any shape, any float dtype (kept native on the HBM<->VMEM path).
    log_beta: scalar learned parameter.
    """
    orig_shape = x.shape
    dtype = x.dtype
    n = x.size
    itemsize = jnp.dtype(dtype).itemsize
    # Packed sublane granularity: 8 for f32, 16 for bf16, 32 for 8-bit dtypes.
    sublane = (8 * 4) // itemsize

    # Flatten and lay out lane-dense as (rows, 128); rows padded only to a
    # multiple of the sublane count so loads/stores are full vector ops.
    xf = x.reshape(-1)
    rows_needed = max(1, pl.cdiv(n, LANE))
    rows_padded = _round_up(rows_needed, sublane)
    pad = rows_padded * LANE - n
    if pad:
        xf = jnp.pad(xf, (0, pad))
    x2d = xf.reshape(rows_padded, LANE)

    # Tile: ~target_tile_bytes per block (8192 rows f32 / 16384 rows bf16).
    # Resident VMEM ~ 4x tile (double-buffered in + out) ~= 16 MiB.
    tm_full = max(sublane,
                  (target_tile_bytes // (LANE * itemsize)) // sublane * sublane)
    tm = min(tm_full, rows_padded)
    grid = (pl.cdiv(rows_padded, tm),)

    # beta / 1/beta as true scalars (single parameter-derived values, computed
    # once per forward regardless of x size) passed via SMEM.
    log_beta_f32 = jnp.asarray(log_beta, jnp.float32)
    beta = jnp.exp(log_beta_f32)
    params = jnp.stack([beta, 1.0 / beta]).reshape(2)

    cost = pl.CostEstimate(
        flops=5 * n,                       # mul, mul, cmp, select
        transcendentals=2 * n,             # exp + log1p per element
        bytes_accessed=2 * n * itemsize + 8,
    )

    out2d = pl.pallas_call(
        learned_softplus_kernel,
        out_shape=jax.ShapeDtypeStruct((rows_padded, LANE), dtype),
        grid=grid,
        in_specs=[
            pl.BlockSpec((tm, LANE), lambda i: (i, 0)),
            pl.BlockSpec(memory_space=pltpu.MemorySpace.SMEM),
        ],
        out_specs=pl.BlockSpec((tm, LANE), lambda i: (i, 0)),
        compiler_params=pltpu.CompilerParams(
            dimension_semantics=("parallel",),
            vmem_limit_bytes=32 << 20,
        ),
        cost_estimate=cost,
    )(x2d, params)

    out_flat = out2d.reshape(-1)
    if pad:
        out_flat = out_flat[:n]
    return out_flat.reshape(orig_shape)


def learned_softplus_ref(x, log_beta):
    xf = x.astype(jnp.float32)
    beta = jnp.exp(jnp.asarray(log_beta, jnp.float32))
    beta_x = beta * xf
    return jnp.where(beta_x < THRESHOLD,
                     jnp.log1p(jnp.exp(beta_x)) / beta, xf).astype(x.dtype)


if __name__ == "__main__":
    key = jax.random.PRNGKey(0)
    key, kx, ko = jax.random.split(key, 3)

    # Small 4-D activation tensor, like a conv feature map.
    x = jax.random.normal(kx, (2, 4, 16, 16), jnp.float32) * 6.0
    # Force both branches of the where() (beta_x >= 20 and << 0).
    x = x.at[0, 0, 0, 0].set(25.0)
    x = x.at[0, 0, 0, 1].set(-25.0)

    # Learned parameter: log_beta = log(init_beta); pick a non-trivial beta.
    log_beta = jnp.log(jnp.float32(1.5))

    out = jax.block_until_ready(learned_softplus_pallas(x, log_beta))
    ref = learned_softplus_ref(x, log_beta)
    assert out.shape == x.shape and out.dtype == x.dtype
    assert jnp.allclose(out, ref, atol=1e-5, rtol=1e-5), "f32 mismatch"

    # Odd-sized input: exercises the pad + partial-block path.
    x_odd = jax.random.normal(ko, (3, 5, 7), jnp.float32) * 4.0
    out_odd = jax.block_until_ready(learned_softplus_pallas(x_odd, log_beta))
    ref_odd = learned_softplus_ref(x_odd, log_beta)
    assert out_odd.shape == x_odd.shape
    assert jnp.allclose(out_odd, ref_odd, atol=1e-5, rtol=1e-5), "odd-shape mismatch"

    # bf16 input: exercises the native-dtype (no f32 round trip) path.
    x_bf16 = x.astype(jnp.bfloat16)
    out_bf16 = jax.block_until_ready(learned_softplus_pallas(x_bf16, log_beta))
    ref_bf16 = learned_softplus_ref(x_bf16, log_beta)
    assert out_bf16.dtype == jnp.bfloat16
    assert jnp.allclose(out_bf16.astype(jnp.float32),
                        ref_bf16.astype(jnp.float32),
                        atol=3e-2, rtol=3e-2), "bf16 mismatch"

    print("KERNEL_OK")
</pallas_src>

<mosaic_0001>
module attributes {stable_mosaic.version = 11 : i64} {
  func.func @learned_softplus_kernel(%arg0: i32, %arg1: memref<16x128xf32, #tpu.memory_space<vmem>>, %arg2: memref<2xf32, #tpu.memory_space<smem>>, %arg3: memref<16x128xf32, #tpu.memory_space<vmem>>) attributes {dimension_semantics = [#tpu.dimension_semantics<parallel>], iteration_bounds = array<i64: 1>, scalar_prefetch = 0 : i64, scratch_operands = 0 : i64, tpu.core_type = #tpu.core_type<tc>, window_params = [{transform_indices = @transform_0, window_bounds = array<i64: 16, 128>}, {transform_indices = @transform_1, window_bounds = array<i64: 2>}, {transform_indices = @transform_2, window_bounds = array<i64: 16, 128>}]} {
    %c0 = arith.constant 0 : index
    %0 = memref.load %arg2[%c0] : memref<2xf32, #tpu.memory_space<smem>>
    %c1 = arith.constant 1 : index
    %1 = memref.load %arg2[%c1] : memref<2xf32, #tpu.memory_space<smem>>
    %c0_0 = arith.constant 0 : index
    %c0_1 = arith.constant 0 : index
    %2 = vector.load %arg1[%c0_0, %c0_1] : memref<16x128xf32, #tpu.memory_space<vmem>>, vector<16x128xf32>
    %3 = vector.broadcast %0 : f32 to vector<16x128xf32>
    %4 = arith.mulf %3, %2 : vector<16x128xf32>
    %5 = math.exp %4 : vector<16x128xf32>
    %6 = math.log1p %5 : vector<16x128xf32>
    %7 = vector.broadcast %1 : f32 to vector<16x128xf32>
    %8 = arith.mulf %6, %7 : vector<16x128xf32>
    %cst = arith.constant 2.000000e+01 : f32
    %9 = vector.broadcast %cst : f32 to vector<16x128xf32>
    %10 = arith.cmpf olt, %4, %9 : vector<16x128xf32>
    %11 = arith.select %10, %8, %2 : vector<16x128xi1>, vector<16x128xf32>
    %c0_2 = arith.constant 0 : index
    %c0_3 = arith.constant 0 : index
    %12 = vector.load %arg3[%c0_2, %c0_3] : memref<16x128xf32, #tpu.memory_space<vmem>>, vector<16x128xf32>
    tpu.vector_store %arg3[%c0_2, %c0_3], %11 {strides = array<i32>} : memref<16x128xf32, #tpu.memory_space<vmem>>, vector<16x128xf32>,
    return
  }
  func.func @transform_0(%arg0: i32) -> (i32, i32) {
    %c0_i32 = arith.constant 0 : i32
    %c0_i32_0 = arith.constant 0 : i32
    return %arg0, %c0_i32 : i32, i32
  }
  func.func @transform_1(%arg0: i32) -> i32 {
    %c0_i32 = arith.constant 0 : i32
    %c0_i32_0 = arith.constant 0 : i32
    return %c0_i32 : i32
  }
  func.func @transform_2(%arg0: i32) -> (i32, i32) {
    %c0_i32 = arith.constant 0 : i32
    %c0_i32_0 = arith.constant 0 : i32
    return %arg0, %c0_i32 : i32, i32
  }
}

</mosaic_0001>

<llo_original>
// kernel: tpu_custom_call.1
$region0: #{tpu_custom_call.1}
  #allocation0 [shape = 'u32[]', space=smem, size = 0x4, offset = 0x4, fixed_abs, tag = 'smem constant byte address 0x4 - core index']
  #allocation1 [shape = 'u32[144,128]{1,0:T(1,128)}', space=vmem, size = 0x12000, scoped, tag = 'internal scratch']
  %s0 = inlined_call_operand.hbm [shape: f32[16,128], index: 0, kind: input, shape index: {}]
  %s1 = inlined_call_operand.vmem [shape: f32[2], index: 1, kind: input, shape index: {}]
  %s2 = inlined_call_operand.hbm [shape: f32[16,128], index: 2, kind: output, shape index: {}]
  %s3 = sld [smem:[#allocation0]]
  $region26: #{tpu_custom_call.1} parent=0
    _
  %s5 = ssub.s32 1, %s3
  %s6 = scalar_select 0, %s5, %s3
  $region1: #{tpu_custom_call.1} parent=0
    #allocation2 [shape = 'u8[8192]{0}', space=vmem, size = 0x2000, scoped, tag = 'input window, operand 0, single buffered']
    #allocation3 [shape = 's32[1]{0}', space=sflag, size = 0x4, scoped, tag = 'scoped memory for tpu_custom_call.1']
    #allocation4 [shape = 's32[1]{0}', space=sflag, size = 0x4, scoped, tag = 'scoped memory for tpu_custom_call.1']
    #allocation5 [shape = 's32[1]{0}', space=sflag, size = 0x4, scoped, tag = 'scoped memory for tpu_custom_call.1']
    #allocation6 [shape = 'u8[512]{0}', space=smem, size = 0x200, scoped, tag = 'input window, operand 1, single buffered']
    #allocation7 [shape = 'u8[8192]{0}', space=vmem, size = 0x2000, scoped, tag = 'output window, operand 0, single buffered']
    %7 = vsyncpa [#allocation3], 0
    %8 = vsyncpa [#allocation5], 0
    %9 = vsyncpa [#allocation4], 0
    // Predicated region
    $region2: #{tpu_custom_call.1} parent=1 // pred_check
      _
    $region3: #{tpu_custom_call.1} parent=1 // pred_check_branch
      %11 = sbr.rel (0) target = $region5
    $region4: #{tpu_custom_call.1} parent=1 // pred_region
      %s13 = ssub.s32 256, 256
      %14 = vsyncadd [#allocation3], %s13
      %s15 = sshll.u32 [#allocation2], 4
      %s16 = int_to_ptr.vmem [resolvable:$true] %s15
      %21 = dma.hbm_to_vmem [thread:$0]  %s0, 256, %s16, [#allocation3], 128, 128, 8
    $region5: #{tpu_custom_call.1} parent=1 // pred_fallthru
      _
    // Predicated region
    $region6: #{tpu_custom_call.1} parent=1 // pred_check
      _
    $region7: #{tpu_custom_call.1} parent=1 // pred_check_branch
      %23 = sbr.rel (0) target = $region9
    $region8: #{tpu_custom_call.1} parent=1 // pred_region
      %s25 = ssub.s32 16, 16
      %26 = vsyncadd [#allocation5], %s25
      %s28 = sshll.u32 %s1, 4
      %s29 = int_to_ptr.vmem [resolvable:$true] %s28
      %31 = dma.vmem_to_smem %s29, 16, [#allocation6], [#allocation5]
    $region9: #{tpu_custom_call.1} parent=1 // pred_fallthru
      _
    // Predicated region
    $region10: #{tpu_custom_call.1} parent=1 // pred_check
      _
    $region11: #{tpu_custom_call.1} parent=1 // pred_check_branch
      %33 = sbr.rel (0) target = $region13
    $region12: #{tpu_custom_call.1} parent=1 // pred_region
      %34 = dma.done [#allocation3], 256
    $region13: #{tpu_custom_call.1} parent=1 // pred_fallthru
      _
    // Predicated region
    $region14: #{tpu_custom_call.1} parent=1 // pred_check
      _
    $region15: #{tpu_custom_call.1} parent=1 // pred_check_branch
      %36 = sbr.rel (0) target = $region17
    $region16: #{tpu_custom_call.1} parent=1 // pred_region
      %37 = dma.done [#allocation5], 16
    $region17: #{tpu_custom_call.1} parent=1 // pred_fallthru
      _
    %38 = sfence
    %s39 = sld [smem:[#allocation6]]
    %s40 = sld [smem:[#allocation6 + $0x1]]
    %v41 = vld [vmem:[#allocation2] sm:$0xff]
    %v42 = vld [vmem:[#allocation2 + $0x8] sm:$0xff]
    %v43 = vstv %s39
    %v44 = vmul.f32 %v43, %v41
    %v45 = vmul.f32 %v43, %v42
    %v46 = vmul.f32 %v44, 1.442695
    %v47 = vpow.pop %v46
    %v48 = vmul.f32 %v45, 1.442695
    %v49 = vpow.pop %v48
    %v50 = vadd.f32 %v47, 1.0
    %v51 = vlog2.pop %v50
    %v52 = vmul.f32 %v51, 0.6931472
    %v53 = vmul.f32 -0.5, %v47
    %v54 = vadd.f32 %v53, 1.0
    %v55 = vmul.f32 %v54, %v47
    %v56 = vand.u32 2147483647, %v47
    %vm57 = vcmp.lt.f32.partialorder %v56, 0.0004427343
    %v58 = vsel %vm57, %v55, %v52
    %v59 = vadd.f32 %v49, 1.0
    %v60 = vlog2.pop %v59
    %v61 = vmul.f32 %v60, 0.6931472
    %v62 = vmul.f32 -0.5, %v49
    %v63 = vadd.f32 %v62, 1.0
    %v64 = vmul.f32 %v63, %v49
    %v65 = vand.u32 2147483647, %v49
    %vm66 = vcmp.lt.f32.partialorder %v65, 0.0004427343
    %v67 = vsel %vm66, %v64, %v61
    %v68 = vstv %s40
    %v69 = vmul.f32 %v58, %v68
    %v70 = vmul.f32 %v67, %v68
    %vm71 = vcmp.lt.f32.partialorder %v44, 20.0
    %vm72 = vcmp.lt.f32.partialorder %v45, 20.0
    %v73 = vsel %vm71, %v69, %v41
    %v74 = vsel %vm72, %v70, %v42
    %75 = vst [vmem:[#allocation7] sm:$0xff] %v73
    %76 = vst [vmem:[#allocation7 + $0x8] sm:$0xff] %v74
    // Predicated region
    $region18: #{tpu_custom_call.1} parent=1 // pred_check
      _
    $region19: #{tpu_custom_call.1} parent=1 // pred_check_branch
      %78 = sbr.rel (0) target = $region21
    $region20: #{tpu_custom_call.1} parent=1 // pred_region
      %s80 = ssub.s32 256, 256
      %81 = vsyncadd [#allocation4], %s80
      %s82 = sshll.u32 [#allocation7], 4
      %s83 = int_to_ptr.vmem [resolvable:$true] %s82
      %88 = dma.vmem_to_hbm [thread:$0]  %s83, 256, %s2, [#allocation4], 128, 128, 8
    $region21: #{tpu_custom_call.1} parent=1 // pred_fallthru
      _
    // Predicated region
    $region22: #{tpu_custom_call.1} parent=1 // pred_check
      _
    $region23: #{tpu_custom_call.1} parent=1 // pred_check_branch
      %90 = sbr.rel (0) target = $region25
    $region24: #{tpu_custom_call.1} parent=1 // pred_region
      %91 = dma.done [#allocation4], 256
    $region25: #{tpu_custom_call.1} parent=1 // pred_fallthru
      _
    %92 = vsyncpa [#allocation3], 1
    %93 = vsyncpa [#allocation4], 1
    %94 = vsyncpa [#allocation5], 1

</llo_original>
